<compile_context>
chip_gen: v6e
topology: v6e:2x2x1
jax: 0.10.0
libtpu: 0.0.40
codegen_flags: <defaults>
</compile_context>

<pallas_src>
import jax
import jax.numpy as jnp
from jax.experimental import pallas as pl
from jax.experimental.pallas import tpu as pltpu


HIDDEN = 256
LOG_STD_MIN = -20.0
LOG_STD_MAX = 2.0


def _split_bf16(v):
    """Split an f32 array into bf16 hi + bf16 lo with hi + lo ~= v (~16 mantissa bits)."""
    hi = v.astype(jnp.bfloat16)
    lo = (v - hi.astype(jnp.float32)).astype(jnp.bfloat16)
    return hi, lo


def _dot3(x_f32, w_hi, w_lo):
    """bf16_3x matmul: three bf16 MXU passes accumulated in f32 (near-f32 accuracy)."""
    x_hi, x_lo = _split_bf16(x_f32)
    acc = jnp.dot(x_hi, w_hi, preferred_element_type=jnp.float32)
    acc = acc + jnp.dot(x_lo, w_hi, preferred_element_type=jnp.float32)
    acc = acc + jnp.dot(x_hi, w_lo, preferred_element_type=jnp.float32)
    return acc


def _policy_kernel(x_ref, w1h_ref, w1l_ref, b1_ref, w2h_ref, w2l_ref, b2_ref,
                   whh_ref, whl_ref, bh_ref, out_ref):
    head_pad = out_ref.shape[-1] // 2
    x = x_ref[...]

    # fc1 + relu
    h1 = _dot3(x, w1h_ref[...], w1l_ref[...]) + b1_ref[...]
    h1 = jnp.maximum(h1, 0.0)

    # fc2 + relu
    h2 = _dot3(h1, w2h_ref[...], w2l_ref[...]) + b2_ref[...]
    h2 = jnp.maximum(h2, 0.0)

    # fused heads: lanes [0, head_pad) = mean, lanes [head_pad, 2*head_pad) = log_std
    heads = _dot3(h2, whh_ref[...], whl_ref[...]) + bh_ref[...]

    # Two full-slab (128-lane aligned) writes: mean passes through unclipped;
    # clamp(-20, 2) is applied BEFORE exp so padded lanes / garbage batch rows
    # can never produce inf/NaN.
    out_ref[:, :head_pad] = heads[:, :head_pad].astype(out_ref.dtype)
    out_ref[:, head_pad:] = jnp.exp(
        jnp.clip(heads[:, head_pad:], LOG_STD_MIN, LOG_STD_MAX)
    ).astype(out_ref.dtype)


def continuous_policy_forward(x, params, *, block_b=1024):
    """x: [B, input_dim] float32. Returns (mean, std), each [B, output_dim]."""
    w1, b1, w2, b2, wm, bm, ws, bs = params
    B, input_dim = x.shape
    out_dim = wm.shape[1]

    # Pad each head to a full 128-lane slab and fuse them side by side.
    head_pad = max(128, ((out_dim + 127) // 128) * 128)
    wh = jnp.zeros((HIDDEN, 2 * head_pad), jnp.float32)
    wh = wh.at[:, :out_dim].set(wm)
    wh = wh.at[:, head_pad:head_pad + out_dim].set(ws)
    bh = jnp.zeros((1, 2 * head_pad), jnp.float32)
    bh = bh.at[:, :out_dim].set(bm)
    bh = bh.at[:, head_pad:head_pad + out_dim].set(bs)

    # One-time bf16 hi/lo split of the weights (fed to the bf16 MXU path).
    w1h, w1l = _split_bf16(w1)
    w2h, w2l = _split_bf16(w2)
    whh, whl = _split_bf16(wh)

    # Batch tiling: at least two tiles whenever B >= 16 so v7x's two
    # TensorCores both get work; tiles are multiples of 8 (sublane rule).
    if B >= 16:
        half = -(-B // 2)
        half = -(-half // 8) * 8
        tb = min(block_b, half)
    else:
        tb = B
    grid = (pl.cdiv(B, tb),)

    act_spec = pl.BlockSpec((tb, input_dim), lambda i: (i, 0))
    out_spec = pl.BlockSpec((tb, 2 * head_pad), lambda i: (i, 0))

    def resident(shape):
        # Constant index_map => weights stay VMEM-resident across batch tiles.
        return pl.BlockSpec(shape, lambda i: (0, 0))

    flops = 3 * 2 * B * (input_dim * HIDDEN + HIDDEN * HIDDEN + HIDDEN * 2 * head_pad)
    bytes_accessed = (4 * (x.size + b1.size + b2.size + bh.size + B * 2 * head_pad)
                      + 2 * 2 * (w1.size + w2.size + wh.size))

    packed = pl.pallas_call(
        _policy_kernel,
        out_shape=jax.ShapeDtypeStruct((B, 2 * head_pad), jnp.float32),
        grid=grid,
        in_specs=[
            act_spec,
            resident(w1h.shape), resident(w1l.shape), resident(b1.shape),
            resident(w2h.shape), resident(w2l.shape), resident(b2.shape),
            resident(whh.shape), resident(whl.shape), resident(bh.shape),
        ],
        out_specs=out_spec,
        compiler_params=pltpu.CompilerParams(
            dimension_semantics=("parallel",)),
        cost_estimate=pl.CostEstimate(
            flops=flops,
            transcendentals=B * head_pad,
            bytes_accessed=bytes_accessed),
    )(x, w1h, w1l, b1, w2h, w2l, b2, whh, whl, bh)

    mean = packed[:, :out_dim]
    std = packed[:, head_pad:head_pad + out_dim]
    return mean, std


def init_params(key, input_dim, output_dim):
    """Deterministic synthetic parameters (PyTorch-Linear-like, transposed)."""
    ks = jax.random.split(key, 8)

    def linear(kw, kb, fan_in, fan_out):
        bound = 1.0 / jnp.sqrt(fan_in)
        w = jax.random.uniform(kw, (fan_in, fan_out), jnp.float32, -bound, bound)
        b = jax.random.uniform(kb, (1, fan_out), jnp.float32, -bound, bound)
        return w, b

    w1, b1 = linear(ks[0], ks[1], input_dim, HIDDEN)
    w2, b2 = linear(ks[2], ks[3], HIDDEN, HIDDEN)
    wm, bm = linear(ks[4], ks[5], HIDDEN, output_dim)
    ws, bs = linear(ks[6], ks[7], HIDDEN, output_dim)
    return (w1, b1, w2, b2, wm, bm, ws, bs)


def _reference_forward(x, params):
    w1, b1, w2, b2, wm, bm, ws, bs = params
    h1 = jnp.maximum(x @ w1 + b1, 0.0)
    h2 = jnp.maximum(h1 @ w2 + b2, 0.0)
    mean = h2 @ wm + bm
    log_std = jnp.clip(h2 @ ws + bs, LOG_STD_MIN, LOG_STD_MAX)
    return mean, jnp.exp(log_std)


if __name__ == "__main__":
    key = jax.random.PRNGKey(0)
    k_x, k_p = jax.random.split(key)

    batch = 8
    input_dim = 32
    output_dim = 8

    x = jax.random.normal(k_x, (batch, input_dim), dtype=jnp.float32)
    params = init_params(k_p, input_dim, output_dim)

    mean, std = continuous_policy_forward(x, params)
    jax.block_until_ready((mean, std))

    ref_mean, ref_std = _reference_forward(x, params)
    assert mean.shape == (batch, output_dim) and std.shape == (batch, output_dim)
    # bf16_3x keeps ~1e-5 typical error vs the pure-f32 reference; 5e-4 leaves
    # margin while still catching any real structural mistake.
    assert jnp.allclose(mean, ref_mean, atol=5e-4, rtol=5e-4)
    assert jnp.allclose(std, ref_std, atol=5e-4, rtol=5e-4)
    assert bool(jnp.all(std > 0))

    print("KERNEL_OK")
</pallas_src>

<mosaic_0001>
module attributes {stable_mosaic.version = 11 : i64} {
  func.func @_policy_kernel(%arg0: i32, %arg1: memref<8x32xf32, #tpu.memory_space<vmem>>, %arg2: memref<32x256xbf16, #tpu.memory_space<vmem>>, %arg3: memref<32x256xbf16, #tpu.memory_space<vmem>>, %arg4: memref<1x256xf32, #tpu.memory_space<vmem>>, %arg5: memref<256x256xbf16, #tpu.memory_space<vmem>>, %arg6: memref<256x256xbf16, #tpu.memory_space<vmem>>, %arg7: memref<1x256xf32, #tpu.memory_space<vmem>>, %arg8: memref<256x256xbf16, #tpu.memory_space<vmem>>, %arg9: memref<256x256xbf16, #tpu.memory_space<vmem>>, %arg10: memref<1x256xf32, #tpu.memory_space<vmem>>, %arg11: memref<8x256xf32, #tpu.memory_space<vmem>>) attributes {dimension_semantics = [#tpu.dimension_semantics<parallel>], iteration_bounds = array<i64: 1>, scalar_prefetch = 0 : i64, scratch_operands = 0 : i64, tpu.core_type = #tpu.core_type<tc>, window_params = [{transform_indices = @transform_0, window_bounds = array<i64: 8, 32>}, {pipeline_mode = #tpu.pipeline_mode<synchronous>, transform_indices = @transform_1, window_bounds = array<i64: 32, 256>}, {pipeline_mode = #tpu.pipeline_mode<synchronous>, transform_indices = @transform_2, window_bounds = array<i64: 32, 256>}, {pipeline_mode = #tpu.pipeline_mode<synchronous>, transform_indices = @transform_3, window_bounds = array<i64: 1, 256>}, {pipeline_mode = #tpu.pipeline_mode<synchronous>, transform_indices = @transform_4, window_bounds = array<i64: 256, 256>}, {pipeline_mode = #tpu.pipeline_mode<synchronous>, transform_indices = @transform_5, window_bounds = array<i64: 256, 256>}, {pipeline_mode = #tpu.pipeline_mode<synchronous>, transform_indices = @transform_6, window_bounds = array<i64: 1, 256>}, {pipeline_mode = #tpu.pipeline_mode<synchronous>, transform_indices = @transform_7, window_bounds = array<i64: 256, 256>}, {pipeline_mode = #tpu.pipeline_mode<synchronous>, transform_indices = @transform_8, window_bounds = array<i64: 256, 256>}, {pipeline_mode = #tpu.pipeline_mode<synchronous>, transform_indices = @transform_9, window_bounds = array<i64: 1, 256>}, {transform_indices = @transform_10, window_bounds = array<i64: 8, 256>}]} {
    %c0 = arith.constant 0 : index
    %c0_0 = arith.constant 0 : index
    %0 = vector.load %arg1[%c0, %c0_0] : memref<8x32xf32, #tpu.memory_space<vmem>>, vector<8x32xf32>
    %c0_1 = arith.constant 0 : index
    %c0_2 = arith.constant 0 : index
    %1 = vector.load %arg2[%c0_1, %c0_2] : memref<32x256xbf16, #tpu.memory_space<vmem>>, vector<32x256xbf16>
    %c0_3 = arith.constant 0 : index
    %c0_4 = arith.constant 0 : index
    %2 = vector.load %arg3[%c0_3, %c0_4] : memref<32x256xbf16, #tpu.memory_space<vmem>>, vector<32x256xbf16>
    %3 = arith.truncf %0 : vector<8x32xf32> to vector<8x32xbf16>
    %4 = arith.extf %3 : vector<8x32xbf16> to vector<8x32xf32>
    %5 = arith.subf %0, %4 : vector<8x32xf32>
    %6 = arith.truncf %5 : vector<8x32xf32> to vector<8x32xbf16>
    %cst = arith.constant dense<0.000000e+00> : vector<8x256xf32>
    %7 = tpu.matmul %3, %1, %cst {dimension_numbers = #tpu.dot_dimension_numbers<[1], [0], [0], [1], [0, 0, 1, 1], [], []>} : vector<8x32xbf16>, vector<32x256xbf16>, vector<8x256xf32> -> vector<8x256xf32>
    %cst_5 = arith.constant dense<0.000000e+00> : vector<8x256xf32>
    %8 = tpu.matmul %6, %1, %cst_5 {dimension_numbers = #tpu.dot_dimension_numbers<[1], [0], [0], [1], [0, 0, 1, 1], [], []>} : vector<8x32xbf16>, vector<32x256xbf16>, vector<8x256xf32> -> vector<8x256xf32>
    %9 = arith.addf %7, %8 : vector<8x256xf32>
    %cst_6 = arith.constant dense<0.000000e+00> : vector<8x256xf32>
    %10 = tpu.matmul %3, %2, %cst_6 {dimension_numbers = #tpu.dot_dimension_numbers<[1], [0], [0], [1], [0, 0, 1, 1], [], []>} : vector<8x32xbf16>, vector<32x256xbf16>, vector<8x256xf32> -> vector<8x256xf32>
    %11 = arith.addf %9, %10 : vector<8x256xf32>
    %c0_7 = arith.constant 0 : index
    %c0_8 = arith.constant 0 : index
    %12 = vector.load %arg4[%c0_7, %c0_8] : memref<1x256xf32, #tpu.memory_space<vmem>>, vector<1x256xf32>
    %13 = vector.broadcast %12 : vector<1x256xf32> to vector<8x256xf32>
    %14 = arith.addf %11, %13 : vector<8x256xf32>
    %cst_9 = arith.constant 0.000000e+00 : f32
    %15 = vector.broadcast %cst_9 : f32 to vector<8x256xf32>
    %16 = arith.maximumf %14, %15 : vector<8x256xf32>
    %c0_10 = arith.constant 0 : index
    %c0_11 = arith.constant 0 : index
    %17 = vector.load %arg5[%c0_10, %c0_11] : memref<256x256xbf16, #tpu.memory_space<vmem>>, vector<256x256xbf16>
    %c0_12 = arith.constant 0 : index
    %c0_13 = arith.constant 0 : index
    %18 = vector.load %arg6[%c0_12, %c0_13] : memref<256x256xbf16, #tpu.memory_space<vmem>>, vector<256x256xbf16>
    %19 = arith.truncf %16 : vector<8x256xf32> to vector<8x256xbf16>
    %20 = arith.extf %19 : vector<8x256xbf16> to vector<8x256xf32>
    %21 = arith.subf %16, %20 : vector<8x256xf32>
    %22 = arith.truncf %21 : vector<8x256xf32> to vector<8x256xbf16>
    %cst_14 = arith.constant dense<0.000000e+00> : vector<8x256xf32>
    %23 = tpu.matmul %19, %17, %cst_14 {dimension_numbers = #tpu.dot_dimension_numbers<[1], [0], [0], [1], [0, 0, 1, 1], [], []>} : vector<8x256xbf16>, vector<256x256xbf16>, vector<8x256xf32> -> vector<8x256xf32>
    %cst_15 = arith.constant dense<0.000000e+00> : vector<8x256xf32>
    %24 = tpu.matmul %22, %17, %cst_15 {dimension_numbers = #tpu.dot_dimension_numbers<[1], [0], [0], [1], [0, 0, 1, 1], [], []>} : vector<8x256xbf16>, vector<256x256xbf16>, vector<8x256xf32> -> vector<8x256xf32>
    %25 = arith.addf %23, %24 : vector<8x256xf32>
    %cst_16 = arith.constant dense<0.000000e+00> : vector<8x256xf32>
    %26 = tpu.matmul %19, %18, %cst_16 {dimension_numbers = #tpu.dot_dimension_numbers<[1], [0], [0], [1], [0, 0, 1, 1], [], []>} : vector<8x256xbf16>, vector<256x256xbf16>, vector<8x256xf32> -> vector<8x256xf32>
    %27 = arith.addf %25, %26 : vector<8x256xf32>
    %c0_17 = arith.constant 0 : index
    %c0_18 = arith.constant 0 : index
    %28 = vector.load %arg7[%c0_17, %c0_18] : memref<1x256xf32, #tpu.memory_space<vmem>>, vector<1x256xf32>
    %29 = vector.broadcast %28 : vector<1x256xf32> to vector<8x256xf32>
    %30 = arith.addf %27, %29 : vector<8x256xf32>
    %cst_19 = arith.constant 0.000000e+00 : f32
    %31 = vector.broadcast %cst_19 : f32 to vector<8x256xf32>
    %32 = arith.maximumf %30, %31 : vector<8x256xf32>
    %c0_20 = arith.constant 0 : index
    %c0_21 = arith.constant 0 : index
    %33 = vector.load %arg8[%c0_20, %c0_21] : memref<256x256xbf16, #tpu.memory_space<vmem>>, vector<256x256xbf16>
    %c0_22 = arith.constant 0 : index
    %c0_23 = arith.constant 0 : index
    %34 = vector.load %arg9[%c0_22, %c0_23] : memref<256x256xbf16, #tpu.memory_space<vmem>>, vector<256x256xbf16>
    %35 = arith.truncf %32 : vector<8x256xf32> to vector<8x256xbf16>
    %36 = arith.extf %35 : vector<8x256xbf16> to vector<8x256xf32>
    %37 = arith.subf %32, %36 : vector<8x256xf32>
    %38 = arith.truncf %37 : vector<8x256xf32> to vector<8x256xbf16>
    %cst_24 = arith.constant dense<0.000000e+00> : vector<8x256xf32>
    %39 = tpu.matmul %35, %33, %cst_24 {dimension_numbers = #tpu.dot_dimension_numbers<[1], [0], [0], [1], [0, 0, 1, 1], [], []>} : vector<8x256xbf16>, vector<256x256xbf16>, vector<8x256xf32> -> vector<8x256xf32>
    %cst_25 = arith.constant dense<0.000000e+00> : vector<8x256xf32>
    %40 = tpu.matmul %38, %33, %cst_25 {dimension_numbers = #tpu.dot_dimension_numbers<[1], [0], [0], [1], [0, 0, 1, 1], [], []>} : vector<8x256xbf16>, vector<256x256xbf16>, vector<8x256xf32> -> vector<8x256xf32>
    %41 = arith.addf %39, %40 : vector<8x256xf32>
    %cst_26 = arith.constant dense<0.000000e+00> : vector<8x256xf32>
    %42 = tpu.matmul %35, %34, %cst_26 {dimension_numbers = #tpu.dot_dimension_numbers<[1], [0], [0], [1], [0, 0, 1, 1], [], []>} : vector<8x256xbf16>, vector<256x256xbf16>, vector<8x256xf32> -> vector<8x256xf32>
    %43 = arith.addf %41, %42 : vector<8x256xf32>
    %c0_27 = arith.constant 0 : index
    %c0_28 = arith.constant 0 : index
    %44 = vector.load %arg10[%c0_27, %c0_28] : memref<1x256xf32, #tpu.memory_space<vmem>>, vector<1x256xf32>
    %45 = vector.broadcast %44 : vector<1x256xf32> to vector<8x256xf32>
    %46 = arith.addf %43, %45 : vector<8x256xf32>
    %47 = vector.extract_strided_slice %46 {offsets = [0, 0], sizes = [8, 128], strides = [1, 1]} : vector<8x256xf32> to vector<8x128xf32>
    %c0_29 = arith.constant 0 : index
    %c0_30 = arith.constant 0 : index
    %48 = vector.load %arg11[%c0_29, %c0_30] : memref<8x256xf32, #tpu.memory_space<vmem>>, vector<8x128xf32>
    tpu.vector_store %arg11[%c0_29, %c0_30], %47 {strides = array<i32>} : memref<8x256xf32, #tpu.memory_space<vmem>>, vector<8x128xf32>,
    %49 = vector.extract_strided_slice %46 {offsets = [0, 128], sizes = [8, 128], strides = [1, 1]} : vector<8x256xf32> to vector<8x128xf32>
    %cst_31 = arith.constant -2.000000e+01 : f32
    %cst_32 = arith.constant 2.000000e+00 : f32
    %50 = vector.broadcast %cst_31 : f32 to vector<8x128xf32>
    %51 = arith.maximumf %50, %49 : vector<8x128xf32>
    %52 = vector.broadcast %cst_32 : f32 to vector<8x128xf32>
    %53 = arith.minimumf %52, %51 : vector<8x128xf32>
    %54 = math.exp %53 : vector<8x128xf32>
    %c0_33 = arith.constant 0 : index
    %c128 = arith.constant 128 : index
    %55 = vector.load %arg11[%c0_33, %c128] : memref<8x256xf32, #tpu.memory_space<vmem>>, vector<8x128xf32>
    tpu.vector_store %arg11[%c0_33, %c128], %54 {strides = array<i32>} : memref<8x256xf32, #tpu.memory_space<vmem>>, vector<8x128xf32>,
    return
  }
  func.func @transform_0(%arg0: i32) -> (i32, i32) {
    %c0_i32 = arith.constant 0 : i32
    %c0_i32_0 = arith.constant 0 : i32
    return %arg0, %c0_i32 : i32, i32
  }
  func.func @transform_1(%arg0: i32) -> (i32, i32) {
    %c0_i32 = arith.constant 0 : i32
    %c0_i32_0 = arith.constant 0 : i32
    %c0_i32_1 = arith.constant 0 : i32
    return %c0_i32, %c0_i32_0 : i32, i32
  }
  func.func @transform_2(%arg0: i32) -> (i32, i32) {
    %c0_i32 = arith.constant 0 : i32
    %c0_i32_0 = arith.constant 0 : i32
    %c0_i32_1 = arith.constant 0 : i32
    return %c0_i32, %c0_i32_0 : i32, i32
  }
  func.func @transform_3(%arg0: i32) -> (i32, i32) {
    %c0_i32 = arith.constant 0 : i32
    %c0_i32_0 = arith.constant 0 : i32
    %c0_i32_1 = arith.constant 0 : i32
    return %c0_i32, %c0_i32_0 : i32, i32
  }
  func.func @transform_4(%arg0: i32) -> (i32, i32) {
    %c0_i32 = arith.constant 0 : i32
    %c0_i32_0 = arith.constant 0 : i32
    %c0_i32_1 = arith.constant 0 : i32
    return %c0_i32, %c0_i32_0 : i32, i32
  }
  func.func @transform_5(%arg0: i32) -> (i32, i32) {
    %c0_i32 = arith.constant 0 : i32
    %c0_i32_0 = arith.constant 0 : i32
    %c0_i32_1 = arith.constant 0 : i32
    return %c0_i32, %c0_i32_0 : i32, i32
  }
  func.func @transform_6(%arg0: i32) -> (i32, i32) {
    %c0_i32 = arith.constant 0 : i32
    %c0_i32_0 = arith.constant 0 : i32
    %c0_i32_1 = arith.constant 0 : i32
    return %c0_i32, %c0_i32_0 : i32, i32
  }
  func.func @transform_7(%arg0: i32) -> (i32, i32) {
    %c0_i32 = arith.constant 0 : i32
    %c0_i32_0 = arith.constant 0 : i32
    %c0_i32_1 = arith.constant 0 : i32
    return %c0_i32, %c0_i32_0 : i32, i32
  }
  func.func @transform_8(%arg0: i32) -> (i32, i32) {
    %c0_i32 = arith.constant 0 : i32
    %c0_i32_0 = arith.constant 0 : i32
    %c0_i32_1 = arith.constant 0 : i32
    return %c0_i32, %c0_i32_0 : i32, i32
  }
  func.func @transform_9(%arg0: i32) -> (i32, i32) {
    %c0_i32 = arith.constant 0 : i32
    %c0_i32_0 = arith.constant 0 : i32
    %c0_i32_1 = arith.constant 0 : i32
    return %c0_i32, %c0_i32_0 : i32, i32
  }
  func.func @transform_10(%arg0: i32) -> (i32, i32) {
    %c0_i32 = arith.constant 0 : i32
    %c0_i32_0 = arith.constant 0 : i32
    return %arg0, %c0_i32 : i32, i32
  }
}

</mosaic_0001>

<llo_original>
// kernel: tpu_custom_call.1
$region0: #{tpu_custom_call.1}
  #allocation0 [shape = 'u32[]', space=smem, size = 0x4, offset = 0x4, fixed_abs, tag = 'smem constant byte address 0x4 - core index']
  #allocation1 [shape = 'u32[144,128]{1,0:T(1,128)}', space=vmem, size = 0x12000, scoped, tag = 'internal scratch']
  %s0 = inlined_call_operand.hbm [shape: f32[8,32], index: 0, kind: input, shape index: {}]
  %s1 = inlined_call_operand.hbm [shape: bf16[32,256], index: 1, kind: input, shape index: {}]
  %s2 = inlined_call_operand.hbm [shape: bf16[32,256], index: 2, kind: input, shape index: {}]
  %s3 = inlined_call_operand.vmem [shape: f32[1,256], index: 3, kind: input, shape index: {}]
  %s4 = inlined_call_operand.hbm [shape: bf16[256,256], index: 4, kind: input, shape index: {}]
  %s5 = inlined_call_operand.hbm [shape: bf16[256,256], index: 5, kind: input, shape index: {}]
  %s6 = inlined_call_operand.vmem [shape: f32[1,256], index: 6, kind: input, shape index: {}]
  %s7 = inlined_call_operand.hbm [shape: bf16[256,256], index: 7, kind: input, shape index: {}]
  %s8 = inlined_call_operand.hbm [shape: bf16[256,256], index: 8, kind: input, shape index: {}]
  %s9 = inlined_call_operand.vmem [shape: f32[1,256], index: 9, kind: input, shape index: {}]
  %s10 = inlined_call_operand.hbm [shape: f32[8,256], index: 10, kind: output, shape index: {}]
  %s11 = sld [smem:[#allocation0]]
  $region78: #{tpu_custom_call.1} parent=0
    _
  %s13 = ssub.s32 1, %s11
  %s14 = scalar_select 0, %s13, %s11
  $region1: #{tpu_custom_call.1} parent=0
    #allocation2 [shape = 'u8[4096]{0}', space=vmem, size = 0x1000, scoped, tag = 'input window, operand 0, single buffered']
    #allocation3 [shape = 's32[1]{0}', space=sflag, size = 0x4, scoped, tag = 'scoped memory for tpu_custom_call.1']
    #allocation4 [shape = 's32[1]{0}', space=sflag, size = 0x4, scoped, tag = 'scoped memory for tpu_custom_call.1']
    #allocation5 [shape = 'u8[16384]{0}', space=vmem, size = 0x4000, scoped, tag = 'input window, operand 1, single buffered']
    #allocation6 [shape = 's32[1]{0}', space=sflag, size = 0x4, scoped, tag = 'scoped memory for tpu_custom_call.1']
    #allocation7 [shape = 'u8[16384]{0}', space=vmem, size = 0x4000, scoped, tag = 'input window, operand 2, single buffered']
    #allocation8 [shape = 'u8[131072]{0}', space=vmem, size = 0x20000, scoped, tag = 'input window, operand 4, single buffered']
    #allocation9 [shape = 's32[1]{0}', space=sflag, size = 0x4, scoped, tag = 'scoped memory for tpu_custom_call.1']
    #allocation10 [shape = 'u8[131072]{0}', space=vmem, size = 0x20000, scoped, tag = 'input window, operand 5, single buffered']
    #allocation11 [shape = 'u8[131072]{0}', space=vmem, size = 0x20000, scoped, tag = 'input window, operand 7, single buffered']
    #allocation12 [shape = 's32[1]{0}', space=sflag, size = 0x4, scoped, tag = 'scoped memory for tpu_custom_call.1']
    #allocation13 [shape = 'u8[131072]{0}', space=vmem, size = 0x20000, scoped, tag = 'input window, operand 8, single buffered']
    #allocation14 [shape = 'u8[8192]{0}', space=vmem, size = 0x2000, scoped, tag = 'output window, operand 0, single buffered']
    %15 = vsyncpa [#allocation3], 0
    %16 = vsyncpa [#allocation6], 0
    %17 = vsyncpa [#allocation9], 0
    %18 = vsyncpa [#allocation12], 0
    %19 = vsyncpa [#allocation4], 0
    // Predicated region
    $region2: #{tpu_custom_call.1} parent=1 // pred_check
      _
    $region3: #{tpu_custom_call.1} parent=1 // pred_check_branch
      %21 = sbr.rel (0) target = $region5
    $region4: #{tpu_custom_call.1} parent=1 // pred_region
      %s23 = ssub.s32 128, 128
      %24 = vsyncadd [#allocation3], %s23
      %s26 = sshll.u32 [#allocation2], 4
      %s27 = int_to_ptr.vmem [resolvable:$true] %s26
      %29 = dma.hbm_to_vmem [thread:$0]  %s0, 128, %s27, [#allocation3]
    $region5: #{tpu_custom_call.1} parent=1 // pred_fallthru
      _
    // Predicated region
    $region6: #{tpu_custom_call.1} parent=1 // pred_check
      _
    $region7: #{tpu_custom_call.1} parent=1 // pred_check_branch
      %31 = sbr.rel (0) target = $region9
    $region8: #{tpu_custom_call.1} parent=1 // pred_region
      %s33 = ssub.s32 512, 512
      %34 = vsyncadd [#allocation6], %s33
      %s35 = sshll.u32 [#allocation5], 4
      %s36 = int_to_ptr.vmem [resolvable:$true] %s35
      %41 = dma.hbm_to_vmem [thread:$0]  %s1, 512, %s36, [#allocation6], 128, 128, 8
    $region9: #{tpu_custom_call.1} parent=1 // pred_fallthru
      _
    // Predicated region
    $region10: #{tpu_custom_call.1} parent=1 // pred_check
      _
    $region11: #{tpu_custom_call.1} parent=1 // pred_check_branch
      %43 = sbr.rel (0) target = $region13
    $region12: #{tpu_custom_call.1} parent=1 // pred_region
      %s45 = ssub.s32 512, 512
      %46 = vsyncadd [#allocation6], %s45
      %s47 = sshll.u32 [#allocation7], 4
      %s48 = int_to_ptr.vmem [resolvable:$true] %s47
      %53 = dma.hbm_to_vmem [thread:$0]  %s2, 512, %s48, [#allocation6], 128, 128, 8
    $region13: #{tpu_custom_call.1} parent=1 // pred_fallthru
      _
    // Predicated region
    $region14: #{tpu_custom_call.1} parent=1 // pred_check
      _
    $region15: #{tpu_custom_call.1} parent=1 // pred_check_branch
      %55 = sbr.rel (0) target = $region17
    $region16: #{tpu_custom_call.1} parent=1 // pred_region
      _
    $region17: #{tpu_custom_call.1} parent=1 // pred_fallthru
      _
    // Predicated region
    $region18: #{tpu_custom_call.1} parent=1 // pred_check
      _
    $region19: #{tpu_custom_call.1} parent=1 // pred_check_branch
      %57 = sbr.rel (0) target = $region21
    $region20: #{tpu_custom_call.1} parent=1 // pred_region
      %s59 = ssub.s32 4096, 4096
      %60 = vsyncadd [#allocation9], %s59
      %s61 = sshll.u32 [#allocation8], 4
      %s62 = int_to_ptr.vmem [resolvable:$true] %s61
      %67 = dma.hbm_to_vmem [thread:$0]  %s4, 4096, %s62, [#allocation9], 128, 128, 8
    $region21: #{tpu_custom_call.1} parent=1 // pred_fallthru
      _
    // Predicated region
    $region22: #{tpu_custom_call.1} parent=1 // pred_check
      _
    $region23: #{tpu_custom_call.1} parent=1 // pred_check_branch
      %69 = sbr.rel (0) target = $region25
    $region24: #{tpu_custom_call.1} parent=1 // pred_region
      %s71 = ssub.s32 4096, 4096
      %72 = vsyncadd [#allocation9], %s71
      %s73 = sshll.u32 [#allocation10], 4
      %s74 = int_to_ptr.vmem [resolvable:$true] %s73
      %79 = dma.hbm_to_vmem [thread:$0]  %s5, 4096, %s74, [#allocation9], 128, 128, 8
    $region25: #{tpu_custom_call.1} parent=1 // pred_fallthru
      _
    // Predicated region
    $region26: #{tpu_custom_call.1} parent=1 // pred_check
      _
    $region27: #{tpu_custom_call.1} parent=1 // pred_check_branch
      %81 = sbr.rel (0) target = $region29
    $region28: #{tpu_custom_call.1} parent=1 // pred_region
      _
    $region29: #{tpu_custom_call.1} parent=1 // pred_fallthru
      _
    // Predicated region
    $region30: #{tpu_custom_call.1} parent=1 // pred_check
      _
    $region31: #{tpu_custom_call.1} parent=1 // pred_check_branch
      %83 = sbr.rel (0) target = $region33
    $region32: #{tpu_custom_call.1} parent=1 // pred_region
      %s85 = ssub.s32 4096, 4096
      %86 = vsyncadd [#allocation12], %s85
      %s87 = sshll.u32 [#allocation11], 4
      %s88 = int_to_ptr.vmem [resolvable:$true] %s87
      %93 = dma.hbm_to_vmem [thread:$0]  %s7, 4096, %s88, [#allocation12], 128, 128, 8
    $region33: #{tpu_custom_call.1} parent=1 // pred_fallthru
      _
    // Predicated region
    $region34: #{tpu_custom_call.1} parent=1 // pred_check
      _
    $region35: #{tpu_custom_call.1} parent=1 // pred_check_branch
      %95 = sbr.rel (0) target = $region37
    $region36: #{tpu_custom_call.1} parent=1 // pred_region
      %s97 = ssub.s32 4096, 4096
      %98 = vsyncadd [#allocation12], %s97
      %s99 = sshll.u32 [#allocation13], 4
      %s100 = int_to_ptr.vmem [resolvable:$true] %s99
      %105 = dma.hbm_to_vmem [thread:$0]  %s8, 4096, %s100, [#allocation12], 128, 128, 8
    $region37: #{tpu_custom_call.1} parent=1 // pred_fallthru
      _
    // Predicated region
    $region38: #{tpu_custom_call.1} parent=1 // pred_check
      _
    $region39: #{tpu_custom_call.1} parent=1 // pred_check_branch
      %107 = sbr.rel (0) target = $region41
    $region40: #{tpu_custom_call.1} parent=1 // pred_region
      _
    $region41: #{tpu_custom_call.1} parent=1 // pred_fallthru
      _
    // Predicated region
    $region42: #{tpu_custom_call.1} parent=1 // pred_check
      _
    $region43: #{tpu_custom_call.1} parent=1 // pred_check_branch
      %109 = sbr.rel (0) target = $region45
    $region44: #{tpu_custom_call.1} parent=1 // pred_region
      %110 = dma.done [#allocation3], 128
    $region45: #{tpu_custom_call.1} parent=1 // pred_fallthru
      _
    // Predicated region
    $region46: #{tpu_custom_call.1} parent=1 // pred_check
      _
    $region47: #{tpu_custom_call.1} parent=1 // pred_check_branch
      %112 = sbr.rel (0) target = $region49
    $region48: #{tpu_custom_call.1} parent=1 // pred_region
      %113 = dma.done [#allocation6], 512
    $region49: #{tpu_custom_call.1} parent=1 // pred_fallthru
      _
    // Predicated region
    $region50: #{tpu_custom_call.1} parent=1 // pred_check
      _
    $region51: #{tpu_custom_call.1} parent=1 // pred_check_branch
      %115 = sbr.rel (0) target = $region53
    $region52: #{tpu_custom_call.1} parent=1 // pred_region
      %116 = dma.done [#allocation6], 512
    $region53: #{tpu_custom_call.1} parent=1 // pred_fallthru
      _
    // Predicated region
    $region54: #{tpu_custom_call.1} parent=1 // pred_check
      _
    $region55: #{tpu_custom_call.1} parent=1 // pred_check_branch
      %118 = sbr.rel (0) target = $region57
    $region56: #{tpu_custom_call.1} parent=1 // pred_region
      %119 = dma.done [#allocation9], 4096
    $region57: #{tpu_custom_call.1} parent=1 // pred_fallthru
      _
    // Predicated region
    $region58: #{tpu_custom_call.1} parent=1 // pred_check
      _
    $region59: #{tpu_custom_call.1} parent=1 // pred_check_branch
      %121 = sbr.rel (0) target = $region61
    $region60: #{tpu_custom_call.1} parent=1 // pred_region
      %122 = dma.done [#allocation9], 4096
    $region61: #{tpu_custom_call.1} parent=1 // pred_fallthru
      _
    // Predicated region
    $region62: #{tpu_custom_call.1} parent=1 // pred_check
      _
    $region63: #{tpu_custom_call.1} parent=1 // pred_check_branch
      %124 = sbr.rel (0) target = $region65
    $region64: #{tpu_custom_call.1} parent=1 // pred_region
      %125 = dma.done [#allocation12], 4096
    $region65: #{tpu_custom_call.1} parent=1 // pred_fallthru
      _
    // Predicated region
    $region66: #{tpu_custom_call.1} parent=1 // pred_check
      _
    $region67: #{tpu_custom_call.1} parent=1 // pred_check_branch
      %127 = sbr.rel (0) target = $region69
    $region68: #{tpu_custom_call.1} parent=1 // pred_region
      %128 = dma.done [#allocation12], 4096
    $region69: #{tpu_custom_call.1} parent=1 // pred_fallthru
      _
    %v130 = vld [vmem:[#allocation2] sm:$0xff]
    %v131 = vld [vmem:[#allocation5] sm:$0xff]
    %v132 = vld [vmem:[#allocation5 + $0x8] sm:$0xff]
    %v133 = vld [vmem:[#allocation5 + $0x10] sm:$0xff]
    %v134 = vld [vmem:[#allocation5 + $0x18] sm:$0xff]
    %v135 = vld [vmem:[#allocation7] sm:$0xff]
    %v136 = vld [vmem:[#allocation7 + $0x8] sm:$0xff]
    %v137 = vld [vmem:[#allocation7 + $0x10] sm:$0xff]
    %v138 = vld [vmem:[#allocation7 + $0x18] sm:$0xff]
    %v139 = vpack.c.bf16 %v130, %v130
    %v140 = vunpack.c.l.bf16 %v139
    %v141 = vsub.f32 %v130, %v140
    %v142 = vpack.c.bf16 %v141, %v141
    %v147 = vunpack.c.l.b16 %v131
    %v148 = vunpack.c.h.b16 %v131
    %v149 = vunpack.c.l.b16 %v132
    %v150 = vunpack.c.h.b16 %v132
    %v151 = vunpack.c.l.b16 %v133
    %v152 = vunpack.c.h.b16 %v133
    %v153 = vunpack.c.l.b16 %v134
    %v154 = vunpack.c.h.b16 %v134
    %v155 = vpack.c.b16 %v149, %v147
    %v156 = vpack.c.b16 %v150, %v148
    %v157 = vpack.c.b16 %v153, %v151
    %v158 = vpack.c.b16 %v154, %v152
    %vm163 = vcmask 261120
    %v165 = vsel %vm163, %v142, 0
    %167 = vmatprep.subr.bf16.mxu0 0
    %168 = vmatpush1.bf16.msra.mxu0 0
    %169 = vmatprep.subr.bf16.mxu0 0
    %170 = vmatpush1.bf16.msra.mxu0 0
    %171 = vmatprep.subr.bf16.mxu0 0
    %172 = vmatpush1.bf16.msra.mxu0 0
    %173 = vmatprep.subr.bf16.mxu0 0
    %174 = vmatpush1.bf16.msra.mxu0 0
    %175 = vmatprep.subr.bf16.mxu0 0
    %176 = vmatpush1.bf16.msra.mxu0 0
    %177 = vmatprep.subr.bf16.mxu0 0
    %178 = vmatpush1.bf16.msra.mxu0 0
    %179 = vmatprep.subr.bf16.mxu0 %v158
    %180 = vmatpush1.bf16.msra.mxu0 %v157
    %181 = vmatprep.subr.bf16.mxu0 %v156
    %182 = vmatpush1.bf16.msra.mxu0 %v155
    %183 = vmatprep.subr.bf16.mxu0 0
    %184 = vmatpush2.bf16.msra.mxu0 0
    %185 = vmatprep.subr.bf16.mxu0 0
    %186 = vmatpush2.bf16.msra.mxu0 0
    %187 = vmatprep.subr.bf16.mxu0 0
    %188 = vmatpush2.bf16.msra.mxu0 0
    %189 = vmatprep.subr.bf16.mxu0 0
    %190 = vmatpush2.bf16.msra.mxu0 0
    %191 = vmatprep.subr.bf16.mxu0 0
    %192 = vmatpush2.bf16.msra.mxu0 0
    %193 = vmatprep.subr.bf16.mxu0 0
    %194 = vmatpush2.bf16.msra.mxu0 0
    %195 = vmatprep.subr.bf16.mxu0 0
    %196 = vmatpush2.bf16.msra.mxu0 0
    %197 = vmatprep.subr.bf16.mxu0 0
    %198 = vmatpush2.bf16.msra.mxu0 0
    %199 = vmatprep.mubr.bf16.mxu0 0
    %200 = vmatmul.mubr.bf16.gmra.mxu0 %v165
    %v201 = vpop.f32.mrf.mxu0
    %v202 = vadd.f32 0.0, %v201
    %v203 = vpop.f32.mrf.mxu0
    %v204 = vadd.f32 0.0, %v203
    %v205 = vpop.f32.mrf.mxu0
    %v206 = vpop.f32.mrf.mxu0
    %207 = vdwg.mxu0
    %v209 = vsel %vm163, %v139, 0
    %211 = vmatprep.subr.bf16.mxu0 0
    %212 = vmatpush1.bf16.msra.mxu0 0
    %213 = vmatprep.subr.bf16.mxu0 0
    %214 = vmatpush1.bf16.msra.mxu0 0
    %215 = vmatprep.subr.bf16.mxu0 0
    %216 = vmatpush1.bf16.msra.mxu0 0
    %217 = vmatprep.subr.bf16.mxu0 0
    %218 = vmatpush1.bf16.msra.mxu0 0
    %219 = vmatprep.subr.bf16.mxu0 0
    %220 = vmatpush1.bf16.msra.mxu0 0
    %221 = vmatprep.subr.bf16.mxu0 0
    %222 = vmatpush1.bf16.msra.mxu0 0
    %223 = vmatprep.subr.bf16.mxu0 %v158
    %224 = vmatpush1.bf16.msra.mxu0 %v157
    %225 = vmatprep.subr.bf16.mxu0 %v156
    %226 = vmatpush1.bf16.msra.mxu0 %v155
    %227 = vmatprep.subr.bf16.mxu0 0
    %228 = vmatpush2.bf16.msra.mxu0 0
    %229 = vmatprep.subr.bf16.mxu0 0
    %230 = vmatpush2.bf16.msra.mxu0 0
    %231 = vmatprep.subr.bf16.mxu0 0
    %232 = vmatpush2.bf16.msra.mxu0 0
    %233 = vmatprep.subr.bf16.mxu0 0
    %234 = vmatpush2.bf16.msra.mxu0 0
    %235 = vmatprep.subr.bf16.mxu0 0
    %236 = vmatpush2.bf16.msra.mxu0 0
    %237 = vmatprep.subr.bf16.mxu0 0
    %238 = vmatpush2.bf16.msra.mxu0 0
    %239 = vmatprep.subr.bf16.mxu0 0
    %240 = vmatpush2.bf16.msra.mxu0 0
    %241 = vmatprep.subr.bf16.mxu0 0
    %242 = vmatpush2.bf16.msra.mxu0 0
    %243 = vmatprep.mubr.bf16.mxu0 0
    %244 = vmatmul.mubr.bf16.gmra.mxu0 %v209
    %v245 = vpop.f32.mrf.mxu0
    %v246 = vadd.f32 %v202, %v245
    %v247 = vpop.f32.mrf.mxu0
    %v248 = vadd.f32 %v204, %v247
    %v249 = vpop.f32.mrf.mxu0
    %v250 = vpop.f32.mrf.mxu0
    %251 = vdwg.mxu0
    %v256 = vunpack.c.l.b16 %v135
    %v257 = vunpack.c.h.b16 %v135
    %v258 = vunpack.c.l.b16 %v136
    %v259 = vunpack.c.h.b16 %v136
    %v260 = vunpack.c.l.b16 %v137
    %v261 = vunpack.c.h.b16 %v137
    %v262 = vunpack.c.l.b16 %v138
    %v263 = vunpack.c.h.b16 %v138
    %v264 = vpack.c.b16 %v258, %v256
    %v265 = vpack.c.b16 %v259, %v257
    %v266 = vpack.c.b16 %v262, %v260
    %v267 = vpack.c.b16 %v263, %v261
    %272 = vmatprep.subr.bf16.mxu0 0
    %273 = vmatpush1.bf16.msra.mxu0 0
    %274 = vmatprep.subr.bf16.mxu0 0
    %275 = vmatpush1.bf16.msra.mxu0 0
    %276 = vmatprep.subr.bf16.mxu0 0
    %277 = vmatpush1.bf16.msra.mxu0 0
    %278 = vmatprep.subr.bf16.mxu0 0
    %279 = vmatpush1.bf16.msra.mxu0 0
    %280 = vmatprep.subr.bf16.mxu0 0
    %281 = vmatpush1.bf16.msra.mxu0 0
    %282 = vmatprep.subr.bf16.mxu0 0
    %283 = vmatpush1.bf16.msra.mxu0 0
    %284 = vmatprep.subr.bf16.mxu0 %v267
    %285 = vmatpush1.bf16.msra.mxu0 %v266
    %286 = vmatprep.subr.bf16.mxu0 %v265
    %287 = vmatpush1.bf16.msra.mxu0 %v264
    %288 = vmatprep.subr.bf16.mxu0 0
    %289 = vmatpush2.bf16.msra.mxu0 0
    %290 = vmatprep.subr.bf16.mxu0 0
    %291 = vmatpush2.bf16.msra.mxu0 0
    %292 = vmatprep.subr.bf16.mxu0 0
    %293 = vmatpush2.bf16.msra.mxu0 0
    %294 = vmatprep.subr.bf16.mxu0 0
    %295 = vmatpush2.bf16.msra.mxu0 0
    %296 = vmatprep.subr.bf16.mxu0 0
    %297 = vmatpush2.bf16.msra.mxu0 0
    %298 = vmatprep.subr.bf16.mxu0 0
    %299 = vmatpush2.bf16.msra.mxu0 0
    %300 = vmatprep.subr.bf16.mxu0 0
    %301 = vmatpush2.bf16.msra.mxu0 0
    %302 = vmatprep.subr.bf16.mxu0 0
    %303 = vmatpush2.bf16.msra.mxu0 0
    %304 = vmatprep.mubr.bf16.mxu0 0
    %305 = vmatmul.mubr.bf16.gmra.mxu0 %v209
    %v306 = vpop.f32.mrf.mxu0
    %v307 = vadd.f32 0.0, %v306
    %v308 = vpop.f32.mrf.mxu0
    %v309 = vadd.f32 0.0, %v308
    %v310 = vpop.f32.mrf.mxu0
    %v311 = vpop.f32.mrf.mxu0
    %312 = vdwg.mxu0
    %v313 = vadd.f32 %v246, %v307
    %v314 = vadd.f32 %v248, %v309
    %v315 = vld [vmem:[%s3] sm:$0x3]
    %v317 = vlaneseq
    %v318 = vshrl.u32 %v317, 7
    %v319 = vsub.s32 0, %v318
    %v320 = vrot.slane %v315, %v319
    %v321 = vlaneseq
    %v322 = vshrl.u32 %v321, 7
    %v323 = vsub.s32 1, %v322
    %v324 = vrot.slane %v315, %v323
    %v327 = vadd.f32 %v313, %v320
    %v328 = vadd.f32 %v314, %v324
    %v329 = vmax.f32 %v327, 0.0
    %v330 = vmax.f32 %v328, 0.0
    %v331 = vld [vmem:[#allocation8] sm:$0xff]
    %v332 = vld [vmem:[#allocation8 + $0x8] sm:$0xff]
    %v333 = vld [vmem:[#allocation8 + $0x10] sm:$0xff]
    %v334 = vld [vmem:[#allocation8 + $0x18] sm:$0xff]
    %v335 = vld [vmem:[#allocation8 + $0x20] sm:$0xff]
    %v336 = vld [vmem:[#allocation8 + $0x28] sm:$0xff]
    %v337 = vld [vmem:[#allocation8 + $0x30] sm:$0xff]
    %v338 = vld [vmem:[#allocation8 + $0x38] sm:$0xff]
    %v339 = vld [vmem:[#allocation8 + $0x40] sm:$0xff]
    %v340 = vld [vmem:[#allocation8 + $0x48] sm:$0xff]
    %v341 = vld [vmem:[#allocation8 + $0x50] sm:$0xff]
    %v342 = vld [vmem:[#allocation8 + $0x58] sm:$0xff]
    %v343 = vld [vmem:[#allocation8 + $0x60] sm:$0xff]
    %v344 = vld [vmem:[#allocation8 + $0x68] sm:$0xff]
    %v345 = vld [vmem:[#allocation8 + $0x70] sm:$0xff]
    %v346 = vld [vmem:[#allocation8 + $0x78] sm:$0xff]
    %v347 = vld [vmem:[#allocation8 + $0x80] sm:$0xff]
    %v348 = vld [vmem:[#allocation8 + $0x88] sm:$0xff]
    %v349 = vld [vmem:[#allocation8 + $0x90] sm:$0xff]
    %v350 = vld [vmem:[#allocation8 + $0x98] sm:$0xff]
    %v351 = vld [vmem:[#allocation8 + $0xa0] sm:$0xff]
    %v352 = vld [vmem:[#allocation8 + $0xa8] sm:$0xff]
    %v353 = vld [vmem:[#allocation8 + $0xb0] sm:$0xff]
    %v354 = vld [vmem:[#allocation8 + $0xb8] sm:$0xff]
    %v355 = vld [vmem:[#allocation8 + $0xc0] sm:$0xff]
    %v356 = vld [vmem:[#allocation8 + $0xc8] sm:$0xff]
    %v357 = vld [vmem:[#allocation8 + $0xd0] sm:$0xff]
    %v358 = vld [vmem:[#allocation8 + $0xd8] sm:$0xff]
    %v359 = vld [vmem:[#allocation8 + $0xe0] sm:$0xff]
    %v360 = vld [vmem:[#allocation8 + $0xe8] sm:$0xff]
    %v361 = vld [vmem:[#allocation8 + $0xf0] sm:$0xff]
    %v362 = vld [vmem:[#allocation8 + $0xf8] sm:$0xff]
    %v363 = vld [vmem:[#allocation10] sm:$0xff]
    %v364 = vld [vmem:[#allocation10 + $0x8] sm:$0xff]
    %v365 = vld [vmem:[#allocation10 + $0x10] sm:$0xff]
    %v366 = vld [vmem:[#allocation10 + $0x18] sm:$0xff]
    %v367 = vld [vmem:[#allocation10 + $0x20] sm:$0xff]
    %v368 = vld [vmem:[#allocation10 + $0x28] sm:$0xff]
    %v369 = vld [vmem:[#allocation10 + $0x30] sm:$0xff]
    %v370 = vld [vmem:[#allocation10 + $0x38] sm:$0xff]
    %v371 = vld [vmem:[#allocation10 + $0x40] sm:$0xff]
    %v372 = vld [vmem:[#allocation10 + $0x48] sm:$0xff]
    %v373 = vld [vmem:[#allocation10 + $0x50] sm:$0xff]
    %v374 = vld [vmem:[#allocation10 + $0x58] sm:$0xff]
    %v375 = vld [vmem:[#allocation10 + $0x60] sm:$0xff]
    %v376 = vld [vmem:[#allocation10 + $0x68] sm:$0xff]
    %v377 = vld [vmem:[#allocation10 + $0x70] sm:$0xff]
    %v378 = vld [vmem:[#allocation10 + $0x78] sm:$0xff]
    %v379 = vld [vmem:[#allocation10 + $0x80] sm:$0xff]
    %v380 = vld [vmem:[#allocation10 + $0x88] sm:$0xff]
    %v381 = vld [vmem:[#allocation10 + $0x90] sm:$0xff]
    %v382 = vld [vmem:[#allocation10 + $0x98] sm:$0xff]
    %v383 = vld [vmem:[#allocation10 + $0xa0] sm:$0xff]
    %v384 = vld [vmem:[#allocation10 + $0xa8] sm:$0xff]
    %v385 = vld [vmem:[#allocation10 + $0xb0] sm:$0xff]
    %v386 = vld [vmem:[#allocation10 + $0xb8] sm:$0xff]
    %v387 = vld [vmem:[#allocation10 + $0xc0] sm:$0xff]
    %v388 = vld [vmem:[#allocation10 + $0xc8] sm:$0xff]
    %v389 = vld [vmem:[#allocation10 + $0xd0] sm:$0xff]
    %v390 = vld [vmem:[#allocation10 + $0xd8] sm:$0xff]
    %v391 = vld [vmem:[#allocation10 + $0xe0] sm:$0xff]
    %v392 = vld [vmem:[#allocation10 + $0xe8] sm:$0xff]
    %v393 = vld [vmem:[#allocation10 + $0xf0] sm:$0xff]
    %v394 = vld [vmem:[#allocation10 + $0xf8] sm:$0xff]
    %v395 = vpack.c.bf16 %v329, %v329
    %v396 = vpack.c.bf16 %v330, %v330
    %v397 = vunpack.c.l.bf16 %v395
    %v398 = vunpack.c.l.bf16 %v396
    %v399 = vsub.f32 %v329, %v397
    %v400 = vsub.f32 %v330, %v398
    %v401 = vpack.c.bf16 %v399, %v399
    %v402 = vpack.c.bf16 %v400, %v400
    %v435 = vunpack.c.l.b16 %v331
    %v436 = vunpack.c.h.b16 %v331
    %v437 = vunpack.c.l.b16 %v332
    %v438 = vunpack.c.h.b16 %v332
    %v439 = vunpack.c.l.b16 %v333
    %v440 = vunpack.c.h.b16 %v333
    %v441 = vunpack.c.l.b16 %v334
    %v442 = vunpack.c.h.b16 %v334
    %v443 = vunpack.c.l.b16 %v335
    %v444 = vunpack.c.h.b16 %v335
    %v445 = vunpack.c.l.b16 %v336
    %v446 = vunpack.c.h.b16 %v336
    %v447 = vunpack.c.l.b16 %v337
    %v448 = vunpack.c.h.b16 %v337
    %v449 = vunpack.c.l.b16 %v338
    %v450 = vunpack.c.h.b16 %v338
    %v451 = vunpack.c.l.b16 %v339
    %v452 = vunpack.c.h.b16 %v339
    %v453 = vunpack.c.l.b16 %v340
    %v454 = vunpack.c.h.b16 %v340
    %v455 = vunpack.c.l.b16 %v341
    %v456 = vunpack.c.h.b16 %v341
    %v457 = vunpack.c.l.b16 %v342
    %v458 = vunpack.c.h.b16 %v342
    %v459 = vunpack.c.l.b16 %v343
    %v460 = vunpack.c.h.b16 %v343
    %v461 = vunpack.c.l.b16 %v344
    %v462 = vunpack.c.h.b16 %v344
    %v463 = vunpack.c.l.b16 %v345
    %v464 = vunpack.c.h.b16 %v345
    %v465 = vunpack.c.l.b16 %v346
    %v466 = vunpack.c.h.b16 %v346
    %v467 = vunpack.c.l.b16 %v347
    %v468 = vunpack.c.h.b16 %v347
    %v469 = vunpack.c.l.b16 %v348
    %v470 = vunpack.c.h.b16 %v348
    %v471 = vunpack.c.l.b16 %v349
    %v472 = vunpack.c.h.b16 %v349
    %v473 = vunpack.c.l.b16 %v350
    %v474 = vunpack.c.h.b16 %v350
    %v475 = vunpack.c.l.b16 %v351
    %v476 = vunpack.c.h.b16 %v351
    %v477 = vunpack.c.l.b16 %v352
    %v478 = vunpack.c.h.b16 %v352
    %v479 = vunpack.c.l.b16 %v353
    %v480 = vunpack.c.h.b16 %v353
    %v481 = vunpack.c.l.b16 %v354
    %v482 = vunpack.c.h.b16 %v354
    %v483 = vunpack.c.l.b16 %v355
    %v484 = vunpack.c.h.b16 %v355
    %v485 = vunpack.c.l.b16 %v356
    %v486 = vunpack.c.h.b16 %v356
    %v487 = vunpack.c.l.b16 %v357
    %v488 = vunpack.c.h.b16 %v357
    %v489 = vunpack.c.l.b16 %v358
    %v490 = vunpack.c.h.b16 %v358
    %v491 = vunpack.c.l.b16 %v359
    %v492 = vunpack.c.h.b16 %v359
    %v493 = vunpack.c.l.b16 %v360
    %v494 = vunpack.c.h.b16 %v360
    %v495 = vunpack.c.l.b16 %v361
    %v496 = vunpack.c.h.b16 %v361
    %v497 = vunpack.c.l.b16 %v362
    %v498 = vunpack.c.h.b16 %v362
    %v499 = vpack.c.b16 %v437, %v435
    %v500 = vpack.c.b16 %v438, %v436
    %v501 = vpack.c.b16 %v441, %v439
    %v502 = vpack.c.b16 %v442, %v440
    %v503 = vpack.c.b16 %v445, %v443
    %v504 = vpack.c.b16 %v446, %v444
    %v505 = vpack.c.b16 %v449, %v447
    %v506 = vpack.c.b16 %v450, %v448
    %v507 = vpack.c.b16 %v453, %v451
    %v508 = vpack.c.b16 %v454, %v452
    %v509 = vpack.c.b16 %v457, %v455
    %v510 = vpack.c.b16 %v458, %v456
    %v511 = vpack.c.b16 %v461, %v459
    %v512 = vpack.c.b16 %v462, %v460
    %v513 = vpack.c.b16 %v465, %v463
    %v514 = vpack.c.b16 %v466, %v464
    %v515 = vpack.c.b16 %v469, %v467
    %v516 = vpack.c.b16 %v470, %v468
    %v517 = vpack.c.b16 %v473, %v471
    %v518 = vpack.c.b16 %v474, %v472
    %v519 = vpack.c.b16 %v477, %v475
    %v520 = vpack.c.b16 %v478, %v476
    %v521 = vpack.c.b16 %v481, %v479
    %v522 = vpack.c.b16 %v482, %v480
    %v523 = vpack.c.b16 %v485, %v483
    %v524 = vpack.c.b16 %v486, %v484
    %v525 = vpack.c.b16 %v489, %v487
    %v526 = vpack.c.b16 %v490, %v488
    %v527 = vpack.c.b16 %v493, %v491
    %v528 = vpack.c.b16 %v494, %v492
    %v529 = vpack.c.b16 %v497, %v495
    %v530 = vpack.c.b16 %v498, %v496
    %563 = vmatprep.subr.bf16.mxu0 %v514
    %564 = vmatpush1.bf16.msra.mxu0 %v513
    %565 = vmatprep.subr.bf16.mxu0 %v512
    %566 = vmatpush1.bf16.msra.mxu0 %v511
    %567 = vmatprep.subr.bf16.mxu0 %v510
    %568 = vmatpush1.bf16.msra.mxu0 %v509
    %569 = vmatprep.subr.bf16.mxu0 %v508
    %570 = vmatpush1.bf16.msra.mxu0 %v507
    %571 = vmatprep.subr.bf16.mxu0 %v506
    %572 = vmatpush1.bf16.msra.mxu0 %v505
    %573 = vmatprep.subr.bf16.mxu0 %v504
    %574 = vmatpush1.bf16.msra.mxu0 %v503
    %575 = vmatprep.subr.bf16.mxu0 %v502
    %576 = vmatpush1.bf16.msra.mxu0 %v501
    %577 = vmatprep.subr.bf16.mxu0 %v500
    %578 = vmatpush1.bf16.msra.mxu0 %v499
    %579 = vmatprep.subr.bf16.mxu0 %v530
    %580 = vmatpush2.bf16.msra.mxu0 %v529
    %581 = vmatprep.subr.bf16.mxu0 %v528
    %582 = vmatpush2.bf16.msra.mxu0 %v527
    %583 = vmatprep.subr.bf16.mxu0 %v526
    %584 = vmatpush2.bf16.msra.mxu0 %v525
    %585 = vmatprep.subr.bf16.mxu0 %v524
    %586 = vmatpush2.bf16.msra.mxu0 %v523
    %587 = vmatprep.subr.bf16.mxu0 %v522
    %588 = vmatpush2.bf16.msra.mxu0 %v521
    %589 = vmatprep.subr.bf16.mxu0 %v520
    %590 = vmatpush2.bf16.msra.mxu0 %v519
    %591 = vmatprep.subr.bf16.mxu0 %v518
    %592 = vmatpush2.bf16.msra.mxu0 %v517
    %593 = vmatprep.subr.bf16.mxu0 %v516
    %594 = vmatpush2.bf16.msra.mxu0 %v515
    %595 = vmatprep.mubr.bf16.mxu0 %v402
    %596 = vmatmul.mubr.bf16.gmra.mxu0 %v401
    %v597 = vpop.f32.mrf.mxu0
    %v598 = vadd.f32 0.0, %v597
    %v599 = vpop.f32.mrf.mxu0
    %v600 = vadd.f32 0.0, %v599
    %v601 = vpop.f32.mrf.mxu0
    %v602 = vpop.f32.mrf.mxu0
    %603 = vdwg.mxu0
    %604 = vmatprep.subr.bf16.mxu0 %v514
    %605 = vmatpush1.bf16.msra.mxu0 %v513
    %606 = vmatprep.subr.bf16.mxu0 %v512
    %607 = vmatpush1.bf16.msra.mxu0 %v511
    %608 = vmatprep.subr.bf16.mxu0 %v510
    %609 = vmatpush1.bf16.msra.mxu0 %v509
    %610 = vmatprep.subr.bf16.mxu0 %v508
    %611 = vmatpush1.bf16.msra.mxu0 %v507
    %612 = vmatprep.subr.bf16.mxu0 %v506
    %613 = vmatpush1.bf16.msra.mxu0 %v505
    %614 = vmatprep.subr.bf16.mxu0 %v504
    %615 = vmatpush1.bf16.msra.mxu0 %v503
    %616 = vmatprep.subr.bf16.mxu0 %v502
    %617 = vmatpush1.bf16.msra.mxu0 %v501
    %618 = vmatprep.subr.bf16.mxu0 %v500
    %619 = vmatpush1.bf16.msra.mxu0 %v499
    %620 = vmatprep.subr.bf16.mxu0 %v530
    %621 = vmatpush2.bf16.msra.mxu0 %v529
    %622 = vmatprep.subr.bf16.mxu0 %v528
    %623 = vmatpush2.bf16.msra.mxu0 %v527
    %624 = vmatprep.subr.bf16.mxu0 %v526
    %625 = vmatpush2.bf16.msra.mxu0 %v525
    %626 = vmatprep.subr.bf16.mxu0 %v524
    %627 = vmatpush2.bf16.msra.mxu0 %v523
    %628 = vmatprep.subr.bf16.mxu0 %v522
    %629 = vmatpush2.bf16.msra.mxu0 %v521
    %630 = vmatprep.subr.bf16.mxu0 %v520
    %631 = vmatpush2.bf16.msra.mxu0 %v519
    %632 = vmatprep.subr.bf16.mxu0 %v518
    %633 = vmatpush2.bf16.msra.mxu0 %v517
    %634 = vmatprep.subr.bf16.mxu0 %v516
    %635 = vmatpush2.bf16.msra.mxu0 %v515
    %636 = vmatprep.mubr.bf16.mxu0 %v396
    %637 = vmatmul.mubr.bf16.gmra.mxu0 %v395
    %v638 = vpop.f32.mrf.mxu0
    %v639 = vadd.f32 %v598, %v638
    %v640 = vpop.f32.mrf.mxu0
    %v641 = vadd.f32 %v600, %v640
    %v642 = vpop.f32.mrf.mxu0
    %v643 = vpop.f32.mrf.mxu0
    %644 = vdwg.mxu0
    %v677 = vunpack.c.l.b16 %v363
    %v678 = vunpack.c.h.b16 %v363
    %v679 = vunpack.c.l.b16 %v364
    %v680 = vunpack.c.h.b16 %v364
    %v681 = vunpack.c.l.b16 %v365
    %v682 = vunpack.c.h.b16 %v365
    %v683 = vunpack.c.l.b16 %v366
    %v684 = vunpack.c.h.b16 %v366
    %v685 = vunpack.c.l.b16 %v367
    %v686 = vunpack.c.h.b16 %v367
    %v687 = vunpack.c.l.b16 %v368
    %v688 = vunpack.c.h.b16 %v368
    %v689 = vunpack.c.l.b16 %v369
    %v690 = vunpack.c.h.b16 %v369
    %v691 = vunpack.c.l.b16 %v370
    %v692 = vunpack.c.h.b16 %v370
    %v693 = vunpack.c.l.b16 %v371
    %v694 = vunpack.c.h.b16 %v371
    %v695 = vunpack.c.l.b16 %v372
    %v696 = vunpack.c.h.b16 %v372
    %v697 = vunpack.c.l.b16 %v373
    %v698 = vunpack.c.h.b16 %v373
    %v699 = vunpack.c.l.b16 %v374
    %v700 = vunpack.c.h.b16 %v374
    %v701 = vunpack.c.l.b16 %v375
    %v702 = vunpack.c.h.b16 %v375
    %v703 = vunpack.c.l.b16 %v376
    %v704 = vunpack.c.h.b16 %v376
    %v705 = vunpack.c.l.b16 %v377
    %v706 = vunpack.c.h.b16 %v377
    %v707 = vunpack.c.l.b16 %v378
    %v708 = vunpack.c.h.b16 %v378
    %v709 = vunpack.c.l.b16 %v379
    %v710 = vunpack.c.h.b16 %v379
    %v711 = vunpack.c.l.b16 %v380
    %v712 = vunpack.c.h.b16 %v380
    %v713 = vunpack.c.l.b16 %v381
    %v714 = vunpack.c.h.b16 %v381
    %v715 = vunpack.c.l.b16 %v382
    %v716 = vunpack.c.h.b16 %v382
    %v717 = vunpack.c.l.b16 %v383
    %v718 = vunpack.c.h.b16 %v383
    %v719 = vunpack.c.l.b16 %v384
    %v720 = vunpack.c.h.b16 %v384
    %v721 = vunpack.c.l.b16 %v385
    %v722 = vunpack.c.h.b16 %v385
    %v723 = vunpack.c.l.b16 %v386
    %v724 = vunpack.c.h.b16 %v386
    %v725 = vunpack.c.l.b16 %v387
    %v726 = vunpack.c.h.b16 %v387
    %v727 = vunpack.c.l.b16 %v388
    %v728 = vunpack.c.h.b16 %v388
    %v729 = vunpack.c.l.b16 %v389
    %v730 = vunpack.c.h.b16 %v389
    %v731 = vunpack.c.l.b16 %v390
    %v732 = vunpack.c.h.b16 %v390
    %v733 = vunpack.c.l.b16 %v391
    %v734 = vunpack.c.h.b16 %v391
    %v735 = vunpack.c.l.b16 %v392
    %v736 = vunpack.c.h.b16 %v392
    %v737 = vunpack.c.l.b16 %v393
    %v738 = vunpack.c.h.b16 %v393
    %v739 = vunpack.c.l.b16 %v394
    %v740 = vunpack.c.h.b16 %v394
    %v741 = vpack.c.b16 %v679, %v677
    %v742 = vpack.c.b16 %v680, %v678
    %v743 = vpack.c.b16 %v683, %v681
    %v744 = vpack.c.b16 %v684, %v682
    %v745 = vpack.c.b16 %v687, %v685
    %v746 = vpack.c.b16 %v688, %v686
    %v747 = vpack.c.b16 %v691, %v689
    %v748 = vpack.c.b16 %v692, %v690
    %v749 = vpack.c.b16 %v695, %v693
    %v750 = vpack.c.b16 %v696, %v694
    %v751 = vpack.c.b16 %v699, %v697
    %v752 = vpack.c.b16 %v700, %v698
    %v753 = vpack.c.b16 %v703, %v701
    %v754 = vpack.c.b16 %v704, %v702
    %v755 = vpack.c.b16 %v707, %v705
    %v756 = vpack.c.b16 %v708, %v706
    %v757 = vpack.c.b16 %v711, %v709
    %v758 = vpack.c.b16 %v712, %v710
    %v759 = vpack.c.b16 %v715, %v713
    %v760 = vpack.c.b16 %v716, %v714
    %v761 = vpack.c.b16 %v719, %v717
    %v762 = vpack.c.b16 %v720, %v718
    %v763 = vpack.c.b16 %v723, %v721
    %v764 = vpack.c.b16 %v724, %v722
    %v765 = vpack.c.b16 %v727, %v725
    %v766 = vpack.c.b16 %v728, %v726
    %v767 = vpack.c.b16 %v731, %v729
    %v768 = vpack.c.b16 %v732, %v730
    %v769 = vpack.c.b16 %v735, %v733
    %v770 = vpack.c.b16 %v736, %v734
    %v771 = vpack.c.b16 %v739, %v737
    %v772 = vpack.c.b16 %v740, %v738
    %805 = vmatprep.subr.bf16.mxu0 %v756
    %806 = vmatpush1.bf16.msra.mxu0 %v755
    %807 = vmatprep.subr.bf16.mxu0 %v754
    %808 = vmatpush1.bf16.msra.mxu0 %v753
    %809 = vmatprep.subr.bf16.mxu0 %v752
    %810 = vmatpush1.bf16.msra.mxu0 %v751
    %811 = vmatprep.subr.bf16.mxu0 %v750
    %812 = vmatpush1.bf16.msra.mxu0 %v749
    %813 = vmatprep.subr.bf16.mxu0 %v748
    %814 = vmatpush1.bf16.msra.mxu0 %v747
    %815 = vmatprep.subr.bf16.mxu0 %v746
    %816 = vmatpush1.bf16.msra.mxu0 %v745
    %817 = vmatprep.subr.bf16.mxu0 %v744
    %818 = vmatpush1.bf16.msra.mxu0 %v743
    %819 = vmatprep.subr.bf16.mxu0 %v742
    %820 = vmatpush1.bf16.msra.mxu0 %v741
    %821 = vmatprep.subr.bf16.mxu0 %v772
    %822 = vmatpush2.bf16.msra.mxu0 %v771
    %823 = vmatprep.subr.bf16.mxu0 %v770
    %824 = vmatpush2.bf16.msra.mxu0 %v769
    %825 = vmatprep.subr.bf16.mxu0 %v768
    %826 = vmatpush2.bf16.msra.mxu0 %v767
    %827 = vmatprep.subr.bf16.mxu0 %v766
    %828 = vmatpush2.bf16.msra.mxu0 %v765
    %829 = vmatprep.subr.bf16.mxu0 %v764
    %830 = vmatpush2.bf16.msra.mxu0 %v763
    %831 = vmatprep.subr.bf16.mxu0 %v762
    %832 = vmatpush2.bf16.msra.mxu0 %v761
    %833 = vmatprep.subr.bf16.mxu0 %v760
    %834 = vmatpush2.bf16.msra.mxu0 %v759
    %835 = vmatprep.subr.bf16.mxu0 %v758
    %836 = vmatpush2.bf16.msra.mxu0 %v757
    %837 = vmatprep.mubr.bf16.mxu0 %v396
    %838 = vmatmul.mubr.bf16.gmra.mxu0 %v395
    %v839 = vpop.f32.mrf.mxu0
    %v840 = vadd.f32 0.0, %v839
    %v841 = vpop.f32.mrf.mxu0
    %v842 = vadd.f32 0.0, %v841
    %v843 = vpop.f32.mrf.mxu0
    %v844 = vpop.f32.mrf.mxu0
    %845 = vdwg.mxu0
    %v846 = vadd.f32 %v639, %v840
    %v847 = vadd.f32 %v641, %v842
    %v848 = vld [vmem:[%s6] sm:$0x3]
    %v850 = vlaneseq
    %v851 = vshrl.u32 %v850, 7
    %v852 = vsub.s32 0, %v851
    %v853 = vrot.slane %v848, %v852
    %v854 = vlaneseq
    %v855 = vshrl.u32 %v854, 7
    %v856 = vsub.s32 1, %v855
    %v857 = vrot.slane %v848, %v856
    %v860 = vadd.f32 %v846, %v853
    %v861 = vadd.f32 %v847, %v857
    %v862 = vmax.f32 %v860, 0.0
    %v863 = vmax.f32 %v861, 0.0
    %v864 = vld [vmem:[#allocation11] sm:$0xff]
    %v865 = vld [vmem:[#allocation11 + $0x8] sm:$0xff]
    %v866 = vld [vmem:[#allocation11 + $0x10] sm:$0xff]
    %v867 = vld [vmem:[#allocation11 + $0x18] sm:$0xff]
    %v868 = vld [vmem:[#allocation11 + $0x20] sm:$0xff]
    %v869 = vld [vmem:[#allocation11 + $0x28] sm:$0xff]
    %v870 = vld [vmem:[#allocation11 + $0x30] sm:$0xff]
    %v871 = vld [vmem:[#allocation11 + $0x38] sm:$0xff]
    %v872 = vld [vmem:[#allocation11 + $0x40] sm:$0xff]
    %v873 = vld [vmem:[#allocation11 + $0x48] sm:$0xff]
    %v874 = vld [vmem:[#allocation11 + $0x50] sm:$0xff]
    %v875 = vld [vmem:[#allocation11 + $0x58] sm:$0xff]
    %v876 = vld [vmem:[#allocation11 + $0x60] sm:$0xff]
    %v877 = vld [vmem:[#allocation11 + $0x68] sm:$0xff]
    %v878 = vld [vmem:[#allocation11 + $0x70] sm:$0xff]
    %v879 = vld [vmem:[#allocation11 + $0x78] sm:$0xff]
    %v880 = vld [vmem:[#allocation11 + $0x80] sm:$0xff]
    %v881 = vld [vmem:[#allocation11 + $0x88] sm:$0xff]
    %v882 = vld [vmem:[#allocation11 + $0x90] sm:$0xff]
    %v883 = vld [vmem:[#allocation11 + $0x98] sm:$0xff]
    %v884 = vld [vmem:[#allocation11 + $0xa0] sm:$0xff]
    %v885 = vld [vmem:[#allocation11 + $0xa8] sm:$0xff]
    %v886 = vld [vmem:[#allocation11 + $0xb0] sm:$0xff]
    %v887 = vld [vmem:[#allocation11 + $0xb8] sm:$0xff]
    %v888 = vld [vmem:[#allocation11 + $0xc0] sm:$0xff]
    %v889 = vld [vmem:[#allocation11 + $0xc8] sm:$0xff]
    %v890 = vld [vmem:[#allocation11 + $0xd0] sm:$0xff]
    %v891 = vld [vmem:[#allocation11 + $0xd8] sm:$0xff]
    %v892 = vld [vmem:[#allocation11 + $0xe0] sm:$0xff]
    %v893 = vld [vmem:[#allocation11 + $0xe8] sm:$0xff]
    %v894 = vld [vmem:[#allocation11 + $0xf0] sm:$0xff]
    %v895 = vld [vmem:[#allocation11 + $0xf8] sm:$0xff]
    %v896 = vld [vmem:[#allocation13] sm:$0xff]
    %v897 = vld [vmem:[#allocation13 + $0x8] sm:$0xff]
    %v898 = vld [vmem:[#allocation13 + $0x10] sm:$0xff]
    %v899 = vld [vmem:[#allocation13 + $0x18] sm:$0xff]
    %v900 = vld [vmem:[#allocation13 + $0x20] sm:$0xff]
    %v901 = vld [vmem:[#allocation13 + $0x28] sm:$0xff]
    %v902 = vld [vmem:[#allocation13 + $0x30] sm:$0xff]
    %v903 = vld [vmem:[#allocation13 + $0x38] sm:$0xff]
    %v904 = vld [vmem:[#allocation13 + $0x40] sm:$0xff]
    %v905 = vld [vmem:[#allocation13 + $0x48] sm:$0xff]
    %v906 = vld [vmem:[#allocation13 + $0x50] sm:$0xff]
    %v907 = vld [vmem:[#allocation13 + $0x58] sm:$0xff]
    %v908 = vld [vmem:[#allocation13 + $0x60] sm:$0xff]
    %v909 = vld [vmem:[#allocation13 + $0x68] sm:$0xff]
    %v910 = vld [vmem:[#allocation13 + $0x70] sm:$0xff]
    %v911 = vld [vmem:[#allocation13 + $0x78] sm:$0xff]
    %v912 = vld [vmem:[#allocation13 + $0x80] sm:$0xff]
    %v913 = vld [vmem:[#allocation13 + $0x88] sm:$0xff]
    %v914 = vld [vmem:[#allocation13 + $0x90] sm:$0xff]
    %v915 = vld [vmem:[#allocation13 + $0x98] sm:$0xff]
    %v916 = vld [vmem:[#allocation13 + $0xa0] sm:$0xff]
    %v917 = vld [vmem:[#allocation13 + $0xa8] sm:$0xff]
    %v918 = vld [vmem:[#allocation13 + $0xb0] sm:$0xff]
    %v919 = vld [vmem:[#allocation13 + $0xb8] sm:$0xff]
    %v920 = vld [vmem:[#allocation13 + $0xc0] sm:$0xff]
    %v921 = vld [vmem:[#allocation13 + $0xc8] sm:$0xff]
    %v922 = vld [vmem:[#allocation13 + $0xd0] sm:$0xff]
    %v923 = vld [vmem:[#allocation13 + $0xd8] sm:$0xff]
    %v924 = vld [vmem:[#allocation13 + $0xe0] sm:$0xff]
    %v925 = vld [vmem:[#allocation13 + $0xe8] sm:$0xff]
    %v926 = vld [vmem:[#allocation13 + $0xf0] sm:$0xff]
    %v927 = vld [vmem:[#allocation13 + $0xf8] sm:$0xff]
    %v928 = vpack.c.bf16 %v862, %v862
    %v929 = vpack.c.bf16 %v863, %v863
    %v930 = vunpack.c.l.bf16 %v928
    %v931 = vunpack.c.l.bf16 %v929
    %v932 = vsub.f32 %v862, %v930
    %v933 = vsub.f32 %v863, %v931
    %v934 = vpack.c.bf16 %v932, %v932
    %v935 = vpack.c.bf16 %v933, %v933
    %v968 = vunpack.c.l.b16 %v864
    %v969 = vunpack.c.h.b16 %v864
    %v970 = vunpack.c.l.b16 %v865
    %v971 = vunpack.c.h.b16 %v865
    %v972 = vunpack.c.l.b16 %v866
    %v973 = vunpack.c.h.b16 %v866
    %v974 = vunpack.c.l.b16 %v867
    %v975 = vunpack.c.h.b16 %v867
    %v976 = vunpack.c.l.b16 %v868
    %v977 = vunpack.c.h.b16 %v868
    %v978 = vunpack.c.l.b16 %v869
    %v979 = vunpack.c.h.b16 %v869
    %v980 = vunpack.c.l.b16 %v870
    %v981 = vunpack.c.h.b16 %v870
    %v982 = vunpack.c.l.b16 %v871
    %v983 = vunpack.c.h.b16 %v871
    %v984 = vunpack.c.l.b16 %v872
    %v985 = vunpack.c.h.b16 %v872
    %v986 = vunpack.c.l.b16 %v873
    %v987 = vunpack.c.h.b16 %v873
    %v988 = vunpack.c.l.b16 %v874
    %v989 = vunpack.c.h.b16 %v874
    %v990 = vunpack.c.l.b16 %v875
    %v991 = vunpack.c.h.b16 %v875
    %v992 = vunpack.c.l.b16 %v876
    %v993 = vunpack.c.h.b16 %v876
    %v994 = vunpack.c.l.b16 %v877
    %v995 = vunpack.c.h.b16 %v877
    %v996 = vunpack.c.l.b16 %v878
    %v997 = vunpack.c.h.b16 %v878
    %v998 = vunpack.c.l.b16 %v879
    %v999 = vunpack.c.h.b16 %v879
    %v1000 = vunpack.c.l.b16 %v880
    %v1001 = vunpack.c.h.b16 %v880
    %v1002 = vunpack.c.l.b16 %v881
    %v1003 = vunpack.c.h.b16 %v881
    %v1004 = vunpack.c.l.b16 %v882
    %v1005 = vunpack.c.h.b16 %v882
    %v1006 = vunpack.c.l.b16 %v883
    %v1007 = vunpack.c.h.b16 %v883
    %v1008 = vunpack.c.l.b16 %v884
    %v1009 = vunpack.c.h.b16 %v884
    %v1010 = vunpack.c.l.b16 %v885
    %v1011 = vunpack.c.h.b16 %v885
    %v1012 = vunpack.c.l.b16 %v886
    %v1013 = vunpack.c.h.b16 %v886
    %v1014 = vunpack.c.l.b16 %v887
    %v1015 = vunpack.c.h.b16 %v887
    %v1016 = vunpack.c.l.b16 %v888
    %v1017 = vunpack.c.h.b16 %v888
    %v1018 = vunpack.c.l.b16 %v889
    %v1019 = vunpack.c.h.b16 %v889
    %v1020 = vunpack.c.l.b16 %v890
    %v1021 = vunpack.c.h.b16 %v890
    %v1022 = vunpack.c.l.b16 %v891
    %v1023 = vunpack.c.h.b16 %v891
    %v1024 = vunpack.c.l.b16 %v892
    %v1025 = vunpack.c.h.b16 %v892
    %v1026 = vunpack.c.l.b16 %v893
    %v1027 = vunpack.c.h.b16 %v893
    %v1028 = vunpack.c.l.b16 %v894
    %v1029 = vunpack.c.h.b16 %v894
    %v1030 = vunpack.c.l.b16 %v895
    %v1031 = vunpack.c.h.b16 %v895
    %v1032 = vpack.c.b16 %v970, %v968
    %v1033 = vpack.c.b16 %v971, %v969
    %v1034 = vpack.c.b16 %v974, %v972
    %v1035 = vpack.c.b16 %v975, %v973
    %v1036 = vpack.c.b16 %v978, %v976
    %v1037 = vpack.c.b16 %v979, %v977
    %v1038 = vpack.c.b16 %v982, %v980
    %v1039 = vpack.c.b16 %v983, %v981
    %v1040 = vpack.c.b16 %v986, %v984
    %v1041 = vpack.c.b16 %v987, %v985
    %v1042 = vpack.c.b16 %v990, %v988
    %v1043 = vpack.c.b16 %v991, %v989
    %v1044 = vpack.c.b16 %v994, %v992
    %v1045 = vpack.c.b16 %v995, %v993
    %v1046 = vpack.c.b16 %v998, %v996
    %v1047 = vpack.c.b16 %v999, %v997
    %v1048 = vpack.c.b16 %v1002, %v1000
    %v1049 = vpack.c.b16 %v1003, %v1001
    %v1050 = vpack.c.b16 %v1006, %v1004
    %v1051 = vpack.c.b16 %v1007, %v1005
    %v1052 = vpack.c.b16 %v1010, %v1008
    %v1053 = vpack.c.b16 %v1011, %v1009
    %v1054 = vpack.c.b16 %v1014, %v1012
    %v1055 = vpack.c.b16 %v1015, %v1013
    %v1056 = vpack.c.b16 %v1018, %v1016
    %v1057 = vpack.c.b16 %v1019, %v1017
    %v1058 = vpack.c.b16 %v1022, %v1020
    %v1059 = vpack.c.b16 %v1023, %v1021
    %v1060 = vpack.c.b16 %v1026, %v1024
    %v1061 = vpack.c.b16 %v1027, %v1025
    %v1062 = vpack.c.b16 %v1030, %v1028
    %v1063 = vpack.c.b16 %v1031, %v1029
    %1096 = vmatprep.subr.bf16.mxu0 %v1047
    %1097 = vmatpush1.bf16.msra.mxu0 %v1046
    %1098 = vmatprep.subr.bf16.mxu0 %v1045
    %1099 = vmatpush1.bf16.msra.mxu0 %v1044
    %1100 = vmatprep.subr.bf16.mxu0 %v1043
    %1101 = vmatpush1.bf16.msra.mxu0 %v1042
    %1102 = vmatprep.subr.bf16.mxu0 %v1041
    %1103 = vmatpush1.bf16.msra.mxu0 %v1040
    %1104 = vmatprep.subr.bf16.mxu0 %v1039
    %1105 = vmatpush1.bf16.msra.mxu0 %v1038
    %1106 = vmatprep.subr.bf16.mxu0 %v1037
    %1107 = vmatpush1.bf16.msra.mxu0 %v1036
    %1108 = vmatprep.subr.bf16.mxu0 %v1035
    %1109 = vmatpush1.bf16.msra.mxu0 %v1034
    %1110 = vmatprep.subr.bf16.mxu0 %v1033
    %1111 = vmatpush1.bf16.msra.mxu0 %v1032
    %1112 = vmatprep.subr.bf16.mxu0 %v1063
    %1113 = vmatpush2.bf16.msra.mxu0 %v1062
    %1114 = vmatprep.subr.bf16.mxu0 %v1061
    %1115 = vmatpush2.bf16.msra.mxu0 %v1060
    %1116 = vmatprep.subr.bf16.mxu0 %v1059
    %1117 = vmatpush2.bf16.msra.mxu0 %v1058
    %1118 = vmatprep.subr.bf16.mxu0 %v1057
    %1119 = vmatpush2.bf16.msra.mxu0 %v1056
    %1120 = vmatprep.subr.bf16.mxu0 %v1055
    %1121 = vmatpush2.bf16.msra.mxu0 %v1054
    %1122 = vmatprep.subr.bf16.mxu0 %v1053
    %1123 = vmatpush2.bf16.msra.mxu0 %v1052
    %1124 = vmatprep.subr.bf16.mxu0 %v1051
    %1125 = vmatpush2.bf16.msra.mxu0 %v1050
    %1126 = vmatprep.subr.bf16.mxu0 %v1049
    %1127 = vmatpush2.bf16.msra.mxu0 %v1048
    %1128 = vmatprep.mubr.bf16.mxu0 %v935
    %1129 = vmatmul.mubr.bf16.gmra.mxu0 %v934
    %v1130 = vpop.f32.mrf.mxu0
    %v1131 = vadd.f32 0.0, %v1130
    %v1132 = vpop.f32.mrf.mxu0
    %v1133 = vadd.f32 0.0, %v1132
    %v1134 = vpop.f32.mrf.mxu0
    %v1135 = vpop.f32.mrf.mxu0
    %1136 = vdwg.mxu0
    %1137 = vmatprep.subr.bf16.mxu0 %v1047
    %1138 = vmatpush1.bf16.msra.mxu0 %v1046
    %1139 = vmatprep.subr.bf16.mxu0 %v1045
    %1140 = vmatpush1.bf16.msra.mxu0 %v1044
    %1141 = vmatprep.subr.bf16.mxu0 %v1043
    %1142 = vmatpush1.bf16.msra.mxu0 %v1042
    %1143 = vmatprep.subr.bf16.mxu0 %v1041
    %1144 = vmatpush1.bf16.msra.mxu0 %v1040
    %1145 = vmatprep.subr.bf16.mxu0 %v1039
    %1146 = vmatpush1.bf16.msra.mxu0 %v1038
    %1147 = vmatprep.subr.bf16.mxu0 %v1037
    %1148 = vmatpush1.bf16.msra.mxu0 %v1036
    %1149 = vmatprep.subr.bf16.mxu0 %v1035
    %1150 = vmatpush1.bf16.msra.mxu0 %v1034
    %1151 = vmatprep.subr.bf16.mxu0 %v1033
    %1152 = vmatpush1.bf16.msra.mxu0 %v1032
    %1153 = vmatprep.subr.bf16.mxu0 %v1063
    %1154 = vmatpush2.bf16.msra.mxu0 %v1062
    %1155 = vmatprep.subr.bf16.mxu0 %v1061
    %1156 = vmatpush2.bf16.msra.mxu0 %v1060
    %1157 = vmatprep.subr.bf16.mxu0 %v1059
    %1158 = vmatpush2.bf16.msra.mxu0 %v1058
    %1159 = vmatprep.subr.bf16.mxu0 %v1057
    %1160 = vmatpush2.bf16.msra.mxu0 %v1056
    %1161 = vmatprep.subr.bf16.mxu0 %v1055
    %1162 = vmatpush2.bf16.msra.mxu0 %v1054
    %1163 = vmatprep.subr.bf16.mxu0 %v1053
    %1164 = vmatpush2.bf16.msra.mxu0 %v1052
    %1165 = vmatprep.subr.bf16.mxu0 %v1051
    %1166 = vmatpush2.bf16.msra.mxu0 %v1050
    %1167 = vmatprep.subr.bf16.mxu0 %v1049
    %1168 = vmatpush2.bf16.msra.mxu0 %v1048
    %1169 = vmatprep.mubr.bf16.mxu0 %v929
    %1170 = vmatmul.mubr.bf16.gmra.mxu0 %v928
    %v1171 = vpop.f32.mrf.mxu0
    %v1172 = vadd.f32 %v1131, %v1171
    %v1173 = vpop.f32.mrf.mxu0
    %v1174 = vadd.f32 %v1133, %v1173
    %v1175 = vpop.f32.mrf.mxu0
    %v1176 = vpop.f32.mrf.mxu0
    %1177 = vdwg.mxu0
    %v1210 = vunpack.c.l.b16 %v896
    %v1211 = vunpack.c.h.b16 %v896
    %v1212 = vunpack.c.l.b16 %v897
    %v1213 = vunpack.c.h.b16 %v897
    %v1214 = vunpack.c.l.b16 %v898
    %v1215 = vunpack.c.h.b16 %v898
    %v1216 = vunpack.c.l.b16 %v899
    %v1217 = vunpack.c.h.b16 %v899
    %v1218 = vunpack.c.l.b16 %v900
    %v1219 = vunpack.c.h.b16 %v900
    %v1220 = vunpack.c.l.b16 %v901
    %v1221 = vunpack.c.h.b16 %v901
    %v1222 = vunpack.c.l.b16 %v902
    %v1223 = vunpack.c.h.b16 %v902
    %v1224 = vunpack.c.l.b16 %v903
    %v1225 = vunpack.c.h.b16 %v903
    %v1226 = vunpack.c.l.b16 %v904
    %v1227 = vunpack.c.h.b16 %v904
    %v1228 = vunpack.c.l.b16 %v905
    %v1229 = vunpack.c.h.b16 %v905
    %v1230 = vunpack.c.l.b16 %v906
    %v1231 = vunpack.c.h.b16 %v906
    %v1232 = vunpack.c.l.b16 %v907
    %v1233 = vunpack.c.h.b16 %v907
    %v1234 = vunpack.c.l.b16 %v908
    %v1235 = vunpack.c.h.b16 %v908
    %v1236 = vunpack.c.l.b16 %v909
    %v1237 = vunpack.c.h.b16 %v909
    %v1238 = vunpack.c.l.b16 %v910
    %v1239 = vunpack.c.h.b16 %v910
    %v1240 = vunpack.c.l.b16 %v911
    %v1241 = vunpack.c.h.b16 %v911
    %v1242 = vunpack.c.l.b16 %v912
    %v1243 = vunpack.c.h.b16 %v912
    %v1244 = vunpack.c.l.b16 %v913
    %v1245 = vunpack.c.h.b16 %v913
    %v1246 = vunpack.c.l.b16 %v914
    %v1247 = vunpack.c.h.b16 %v914
    %v1248 = vunpack.c.l.b16 %v915
    %v1249 = vunpack.c.h.b16 %v915
    %v1250 = vunpack.c.l.b16 %v916
    %v1251 = vunpack.c.h.b16 %v916
    %v1252 = vunpack.c.l.b16 %v917
    %v1253 = vunpack.c.h.b16 %v917
    %v1254 = vunpack.c.l.b16 %v918
    %v1255 = vunpack.c.h.b16 %v918
    %v1256 = vunpack.c.l.b16 %v919
    %v1257 = vunpack.c.h.b16 %v919
    %v1258 = vunpack.c.l.b16 %v920
    %v1259 = vunpack.c.h.b16 %v920
    %v1260 = vunpack.c.l.b16 %v921
    %v1261 = vunpack.c.h.b16 %v921
    %v1262 = vunpack.c.l.b16 %v922
    %v1263 = vunpack.c.h.b16 %v922
    %v1264 = vunpack.c.l.b16 %v923
    %v1265 = vunpack.c.h.b16 %v923
    %v1266 = vunpack.c.l.b16 %v924
    %v1267 = vunpack.c.h.b16 %v924
    %v1268 = vunpack.c.l.b16 %v925
    %v1269 = vunpack.c.h.b16 %v925
    %v1270 = vunpack.c.l.b16 %v926
    %v1271 = vunpack.c.h.b16 %v926
    %v1272 = vunpack.c.l.b16 %v927
    %v1273 = vunpack.c.h.b16 %v927
    %v1274 = vpack.c.b16 %v1212, %v1210
    %v1275 = vpack.c.b16 %v1213, %v1211
    %v1276 = vpack.c.b16 %v1216, %v1214
    %v1277 = vpack.c.b16 %v1217, %v1215
    %v1278 = vpack.c.b16 %v1220, %v1218
    %v1279 = vpack.c.b16 %v1221, %v1219
    %v1280 = vpack.c.b16 %v1224, %v1222
    %v1281 = vpack.c.b16 %v1225, %v1223
    %v1282 = vpack.c.b16 %v1228, %v1226
    %v1283 = vpack.c.b16 %v1229, %v1227
    %v1284 = vpack.c.b16 %v1232, %v1230
    %v1285 = vpack.c.b16 %v1233, %v1231
    %v1286 = vpack.c.b16 %v1236, %v1234
    %v1287 = vpack.c.b16 %v1237, %v1235
    %v1288 = vpack.c.b16 %v1240, %v1238
    %v1289 = vpack.c.b16 %v1241, %v1239
    %v1290 = vpack.c.b16 %v1244, %v1242
    %v1291 = vpack.c.b16 %v1245, %v1243
    %v1292 = vpack.c.b16 %v1248, %v1246
    %v1293 = vpack.c.b16 %v1249, %v1247
    %v1294 = vpack.c.b16 %v1252, %v1250
    %v1295 = vpack.c.b16 %v1253, %v1251
    %v1296 = vpack.c.b16 %v1256, %v1254
    %v1297 = vpack.c.b16 %v1257, %v1255
    %v1298 = vpack.c.b16 %v1260, %v1258
    %v1299 = vpack.c.b16 %v1261, %v1259
    %v1300 = vpack.c.b16 %v1264, %v1262
    %v1301 = vpack.c.b16 %v1265, %v1263
    %v1302 = vpack.c.b16 %v1268, %v1266
    %v1303 = vpack.c.b16 %v1269, %v1267
    %v1304 = vpack.c.b16 %v1272, %v1270
    %v1305 = vpack.c.b16 %v1273, %v1271
    %1338 = vmatprep.subr.bf16.mxu0 %v1289
    %1339 = vmatpush1.bf16.msra.mxu0 %v1288
    %1340 = vmatprep.subr.bf16.mxu0 %v1287
    %1341 = vmatpush1.bf16.msra.mxu0 %v1286
    %1342 = vmatprep.subr.bf16.mxu0 %v1285
    %1343 = vmatpush1.bf16.msra.mxu0 %v1284
    %1344 = vmatprep.subr.bf16.mxu0 %v1283
    %1345 = vmatpush1.bf16.msra.mxu0 %v1282
    %1346 = vmatprep.subr.bf16.mxu0 %v1281
    %1347 = vmatpush1.bf16.msra.mxu0 %v1280
    %1348 = vmatprep.subr.bf16.mxu0 %v1279
    %1349 = vmatpush1.bf16.msra.mxu0 %v1278
    %1350 = vmatprep.subr.bf16.mxu0 %v1277
    %1351 = vmatpush1.bf16.msra.mxu0 %v1276
    %1352 = vmatprep.subr.bf16.mxu0 %v1275
    %1353 = vmatpush1.bf16.msra.mxu0 %v1274
    %1354 = vmatprep.subr.bf16.mxu0 %v1305
    %1355 = vmatpush2.bf16.msra.mxu0 %v1304
    %1356 = vmatprep.subr.bf16.mxu0 %v1303
    %1357 = vmatpush2.bf16.msra.mxu0 %v1302
    %1358 = vmatprep.subr.bf16.mxu0 %v1301
    %1359 = vmatpush2.bf16.msra.mxu0 %v1300
    %1360 = vmatprep.subr.bf16.mxu0 %v1299
    %1361 = vmatpush2.bf16.msra.mxu0 %v1298
    %1362 = vmatprep.subr.bf16.mxu0 %v1297
    %1363 = vmatpush2.bf16.msra.mxu0 %v1296
    %1364 = vmatprep.subr.bf16.mxu0 %v1295
    %1365 = vmatpush2.bf16.msra.mxu0 %v1294
    %1366 = vmatprep.subr.bf16.mxu0 %v1293
    %1367 = vmatpush2.bf16.msra.mxu0 %v1292
    %1368 = vmatprep.subr.bf16.mxu0 %v1291
    %1369 = vmatpush2.bf16.msra.mxu0 %v1290
    %1370 = vmatprep.mubr.bf16.mxu0 %v929
    %1371 = vmatmul.mubr.bf16.gmra.mxu0 %v928
    %v1372 = vpop.f32.mrf.mxu0
    %v1373 = vadd.f32 0.0, %v1372
    %v1374 = vpop.f32.mrf.mxu0
    %v1375 = vadd.f32 0.0, %v1374
    %v1376 = vpop.f32.mrf.mxu0
    %v1377 = vpop.f32.mrf.mxu0
    %1378 = vdwg.mxu0
    %v1379 = vadd.f32 %v1172, %v1373
    %v1380 = vadd.f32 %v1174, %v1375
    %v1381 = vld [vmem:[%s9] sm:$0x3]
    %v1383 = vlaneseq
    %v1384 = vshrl.u32 %v1383, 7
    %v1385 = vsub.s32 0, %v1384
    %v1386 = vrot.slane %v1381, %v1385
    %v1387 = vlaneseq
    %v1388 = vshrl.u32 %v1387, 7
    %v1389 = vsub.s32 1, %v1388
    %v1390 = vrot.slane %v1381, %v1389
    %v1393 = vadd.f32 %v1379, %v1386
    %v1394 = vadd.f32 %v1380, %v1390
    %1395 = vst [vmem:[#allocation14] sm:$0xff] %v1393
    %v1396 = vmax.f32 %v1394, -20.0
    %v1397 = vmin.f32 %v1396, 2.0
    %v1398 = vmul.f32 %v1397, 1.442695
    %v1399 = vpow.pop %v1398
    %1400 = vst [vmem:[#allocation14 + $0x8] sm:$0xff] %v1399
    // Predicated region
    $region70: #{tpu_custom_call.1} parent=1 // pred_check
      _
    $region71: #{tpu_custom_call.1} parent=1 // pred_check_branch
      %1402 = sbr.rel (0) target = $region73
    $region72: #{tpu_custom_call.1} parent=1 // pred_region
      %s1404 = ssub.s32 256, 256
      %1405 = vsyncadd [#allocation4], %s1404
      %s1407 = sshll.u32 [#allocation14], 4
      %s1408 = int_to_ptr.vmem [resolvable:$true] %s1407
      %1410 = dma.vmem_to_hbm [thread:$0]  %s1408, 256, %s10, [#allocation4]
    $region73: #{tpu_custom_call.1} parent=1 // pred_fallthru
      _
    // Predicated region
    $region74: #{tpu_custom_call.1} parent=1 // pred_check
      _
    $region75: #{tpu_custom_call.1} parent=1 // pred_check_branch
      %1412 = sbr.rel (0) target = $region77
    $region76: #{tpu_custom_call.1} parent=1 // pred_region
      %1413 = dma.done [#allocation4], 256
    $region77: #{tpu_custom_call.1} parent=1 // pred_fallthru
      _
    %1414 = vsyncpa [#allocation3], 1
    %1415 = vsyncpa [#allocation6], 1
    %1416 = vsyncpa [#allocation9], 1
    %1417 = vsyncpa [#allocation12], 1
    %1418 = vsyncpa [#allocation4], 1

</llo_original>
